<compile_context>
chip_gen: v5e
topology: v5e:2x2
jax: 0.10.0
libtpu: 0.0.40
codegen_flags: <defaults>
</compile_context>

<pallas_src>
import functools

import jax
import jax.numpy as jnp
from jax.experimental import pallas as pl
from jax.experimental.pallas import tpu as pltpu


def _round_up(x, m):
    return (x + m - 1) // m * m


# ------------------------------ Fused kernel --------------------------------


def _fused_conv_bn_relu_kernel(
    x_ref, w_ref, gamma_ref, beta_ref, mask_ref, o_ref, col_ref, *,
    n, cin_p, cout, kh, kw, oh, ow, wp, s_img, eps,
):
    """Conv2d(stride=1) + training-mode BatchNorm2d + ReLU, whole batch, one step.

    x_ref     : (cin_p, (n+1)*s_img)   zero-padded planes, channel-major, spatial
                                       plane flattened on lanes, per-image lane
                                       stride s_img (multiple of 128); trailing
                                       all-zero phantom image keeps tap windows
                                       in bounds.
    w_ref     : (cout, kh*kw*cin_p)    im2col-ordered weights (tap-major, channel).
    gamma_ref : (cout, 1)              BN weight.
    beta_ref  : (cout, 1)              BN bias.
    mask_ref  : (1, n*s_img)           1.0 on lanes that are real output pixels.
    o_ref     : (cout, n*s_img)        pre-BN conv output, rewritten in place
                                       with the normalized+ReLU result.
    col_ref   : (kh*kw*cin_p, n*s_img) VMEM scratch: im2col operand.
    """
    ell = n * s_img

    # 1) im2col: for stride 1 every conv tap is one contiguous lane window of the
    #    folded input, covering ALL images at once.  kh*kw aligned sublane-block
    #    copies into scratch (no strided gather, no per-tap matmul).
    for ih in range(kh):
        for iw in range(kw):
            t = ih * kw + iw
            base = ih * wp + iw
            col_ref[t * cin_p:(t + 1) * cin_p, :] = x_ref[:, base:base + ell]

    # 2) ONE deep-contraction MXU matmul for all taps, channels and images.
    #    (At real Inception channel counts cast operands to bf16 on v6e/v7x; at
    #     cin=4/cout=8 everything is overhead-bound and f32 is fine.)
    o_ref[...] = jnp.dot(w_ref[...], col_ref[...],
                         preferred_element_type=jnp.float32)

    # 3) Training-mode BN statistics in one pass over the VMEM-resident output
    #    block; padded columns / per-image tails are masked out of the sums.
    y = o_ref[...]                                    # (cout, n*s_img)
    ym = y * mask_ref[...]
    inv_count = 1.0 / float(n * oh * ow)
    s1 = jnp.sum(ym, axis=1, keepdims=True)           # per-channel sum
    s2 = jnp.sum(ym * y, axis=1, keepdims=True)       # mask is {0,1} -> sum of squares
    mean = s1 * inv_count
    var = jnp.maximum(s2 * inv_count - mean * mean, 0.0)
    scale = gamma_ref[...] * jax.lax.rsqrt(var + eps)  # rsqrt rides the EUP slot
    shift = beta_ref[...] - mean * scale

    # 4) Normalize + ReLU in place; single lane-dense store (n*s_img % 128 == 0).
    o_ref[...] = jnp.maximum(y * scale + shift, 0.0)


# -------------------------------- Wrapper ------------------------------------


def basic_conv2d(x_nchw, w_oihw, bias, gamma, beta, *, stride=1, padding=0,
                 eps=1e-5):
    """Forward pass of BasicConv2d (training-mode BN). Returns NCHW float32."""
    n, cin, h, w = x_nchw.shape
    cout, cin_w, kh, kw = w_oihw.shape
    assert cin_w == cin
    # TODO(synk): general-stride fallback; the im2col lane-folding below assumes
    # stride == 1 (the instantiated BasicConv2d config).
    assert stride == 1, "only stride=1 is implemented in the fused kernel"

    hp, wp = h + 2 * padding, w + 2 * padding
    oh, ow = hp - kh + 1, wp - kw + 1
    cin_p = _round_up(cin, 8)                  # sublane-align channels
    s_img = _round_up(hp * wp, 128)            # per-image lane stride (lane-dense)
    assert s_img >= oh * wp and s_img >= (kh - 1) * wp + (kw - 1)
    ell = n * s_img
    x_len = (n + 1) * s_img                    # +1 phantom image: tap windows in bounds

    f32 = jnp.float32

    # Layout plumbing only (channel-major throughout; pads/reshapes fuse in XLA):
    #   (N, Cin, H, W) -> (Cin_p, (N+1)*S) with each zero-padded plane flattened
    #   onto the lane axis at stride S.
    xt = jnp.transpose(x_nchw.astype(f32), (1, 0, 2, 3))            # (Cin, N, H, W)
    xt = jnp.pad(xt, ((0, cin_p - cin), (0, 0),
                      (padding, padding), (padding, padding)))      # (Cin_p, N, HP, WP)
    x_fold = jnp.pad(xt.reshape(cin_p, n, hp * wp),
                     ((0, 0), (0, 1), (0, s_img - hp * wp)))        # (Cin_p, N+1, S)
    x_fold = x_fold.reshape(cin_p, x_len)

    # im2col-ordered weights: w2d[co, (ih*kw+iw)*cin_p + ci] = W[co, ci, ih, iw].
    w2d = jnp.transpose(w_oihw.astype(f32), (0, 2, 3, 1))           # (Cout, KH, KW, Cin)
    w2d = jnp.pad(w2d, ((0, 0), (0, 0), (0, 0), (0, cin_p - cin)))
    w2d = w2d.reshape(cout, kh * kw * cin_p)

    gamma2 = gamma.reshape(cout, 1).astype(f32)
    beta2 = beta.reshape(cout, 1).astype(f32)

    # Validity mask over the folded output lanes: integer iota, no float div/floor.
    col_idx = jax.lax.broadcasted_iota(jnp.int32, (oh, wp), 1)
    valid = (col_idx < ow).astype(f32).reshape(oh * wp)
    valid = jnp.pad(valid, (0, s_img - oh * wp))
    mask = jnp.tile(valid, n).reshape(1, ell)

    # NOTE: conv bias intentionally unused -- training-mode BatchNorm subtracts the
    # per-channel batch mean, which cancels a constant per-channel bias exactly.
    # This does NOT hold in eval mode (running_mean/running_var).
    del bias

    fused = pl.pallas_call(
        functools.partial(
            _fused_conv_bn_relu_kernel,
            n=n, cin_p=cin_p, cout=cout, kh=kh, kw=kw, oh=oh, ow=ow,
            wp=wp, s_img=s_img, eps=eps),
        out_shape=jax.ShapeDtypeStruct((cout, ell), f32),
        grid_spec=pltpu.PrefetchScalarGridSpec(
            num_scalar_prefetch=0,
            grid=(1,),
            in_specs=[
                pl.BlockSpec((cin_p, x_len), lambda i: (0, 0)),
                pl.BlockSpec((cout, kh * kw * cin_p), lambda i: (0, 0)),
                pl.BlockSpec((cout, 1), lambda i: (0, 0)),
                pl.BlockSpec((cout, 1), lambda i: (0, 0)),
                pl.BlockSpec((1, ell), lambda i: (0, 0)),
            ],
            out_specs=pl.BlockSpec((cout, ell), lambda i: (0, 0)),
            scratch_shapes=[pltpu.VMEM((kh * kw * cin_p, ell), f32)],
        ),
        # Single grid step: training-mode BN statistics make the whole (tiny)
        # problem one reduction domain.  At real Inception sizes: tile output rows
        # and Cout on a leading "parallel" axis (engages both v7x TensorCores),
        # keep the stats axis "arbitrary", size blocks for v7x's 64 MiB VMEM and
        # set vmem_limit_bytes explicitly.
        compiler_params=pltpu.CompilerParams(
            dimension_semantics=("arbitrary",)),
    )(x_fold, w2d, gamma2, beta2, mask)

    # Drop padded columns / per-image tails and restore NCHW (tiny layout op).
    out = fused.reshape(cout, n, s_img)[:, :, :oh * wp]
    out = out.reshape(cout, n, oh, wp)[:, :, :, :ow]
    return jnp.transpose(out, (1, 0, 2, 3))


# ------------------------------- Reference ------------------------------------


def _reference(x_nchw, w_oihw, bias, gamma, beta, *, stride, padding, eps=1e-5):
    y = jax.lax.conv_general_dilated(
        x_nchw.astype(jnp.float32),
        w_oihw.astype(jnp.float32),
        window_strides=(stride, stride),
        padding=[(padding, padding), (padding, padding)],
        dimension_numbers=("NCHW", "OIHW", "NCHW"),
    ) + bias.reshape(1, -1, 1, 1)
    mean = jnp.mean(y, axis=(0, 2, 3), keepdims=True)
    var = jnp.mean(jnp.square(y - mean), axis=(0, 2, 3), keepdims=True)
    y = (y - mean) * jax.lax.rsqrt(var + eps)
    y = y * gamma.reshape(1, -1, 1, 1) + beta.reshape(1, -1, 1, 1)
    return jnp.maximum(y, 0.0)


# --------------------------------- Main ----------------------------------------


if __name__ == "__main__":
    # Module config: BasicConv2d(in_channels=4, out_channels=8, kernel_size=3,
    #                            stride=1, padding=1)
    N, CIN, H, W = 2, 4, 16, 16
    COUT, K, STRIDE, PAD = 8, 3, 1, 1

    key = jax.random.PRNGKey(0)
    kx, kw_, kb = jax.random.split(key, 3)

    x = jax.random.normal(kx, (N, CIN, H, W), dtype=jnp.float32)
    # Parameter shapes match nn.Conv2d / nn.BatchNorm2d.
    w = jax.random.normal(kw_, (COUT, CIN, K, K), dtype=jnp.float32) * 0.1
    b = jax.random.normal(kb, (COUT,), dtype=jnp.float32) * 0.1
    gamma = jnp.ones((COUT,), dtype=jnp.float32)   # BatchNorm2d default weight
    beta = jnp.zeros((COUT,), dtype=jnp.float32)   # BatchNorm2d default bias

    out = basic_conv2d(x, w, b, gamma, beta, stride=STRIDE, padding=PAD)
    out = jax.block_until_ready(out)

    ref = _reference(x, w, b, gamma, beta, stride=STRIDE, padding=PAD)
    assert out.shape == (N, COUT, H, W), out.shape
    assert jnp.allclose(out, ref, atol=1e-3, rtol=1e-3), float(
        jnp.max(jnp.abs(out - ref))
    )

    print("KERNEL_OK")
</pallas_src>

<mosaic_0001>
module attributes {stable_mosaic.version = 11 : i64} {
  func.func @_fused_conv_bn_relu_kernel(%arg0: i32, %arg1: memref<8x1152xf32, #tpu.memory_space<vmem>>, %arg2: memref<8x72xf32, #tpu.memory_space<vmem>>, %arg3: memref<8x1xf32, #tpu.memory_space<vmem>>, %arg4: memref<8x1xf32, #tpu.memory_space<vmem>>, %arg5: memref<1x768xf32, #tpu.memory_space<vmem>>, %arg6: memref<8x768xf32, #tpu.memory_space<vmem>>, %arg7: memref<72x768xf32, #tpu.memory_space<vmem>>) attributes {dimension_semantics = [#tpu.dimension_semantics<arbitrary>], iteration_bounds = array<i64: 1>, scalar_prefetch = 0 : i64, scratch_operands = 1 : i64, tpu.core_type = #tpu.core_type<tc>, window_params = [{pipeline_mode = #tpu.pipeline_mode<synchronous>, transform_indices = @transform_0, window_bounds = array<i64: 8, 1152>}, {pipeline_mode = #tpu.pipeline_mode<synchronous>, transform_indices = @transform_1, window_bounds = array<i64: 8, 72>}, {pipeline_mode = #tpu.pipeline_mode<synchronous>, transform_indices = @transform_2, window_bounds = array<i64: 8, 1>}, {pipeline_mode = #tpu.pipeline_mode<synchronous>, transform_indices = @transform_3, window_bounds = array<i64: 8, 1>}, {pipeline_mode = #tpu.pipeline_mode<synchronous>, transform_indices = @transform_4, window_bounds = array<i64: 1, 768>}, {pipeline_mode = #tpu.pipeline_mode<synchronous>, transform_indices = @transform_5, window_bounds = array<i64: 8, 768>}]} {
    %c0 = arith.constant 0 : index
    %c0_0 = arith.constant 0 : index
    %0 = vector.load %arg1[%c0, %c0_0] : memref<8x1152xf32, #tpu.memory_space<vmem>>, vector<8x768xf32>
    %c0_1 = arith.constant 0 : index
    %c0_2 = arith.constant 0 : index
    %1 = vector.load %arg7[%c0_1, %c0_2] : memref<72x768xf32, #tpu.memory_space<vmem>>, vector<8x768xf32>
    tpu.vector_store %arg7[%c0_1, %c0_2], %0 {strides = array<i32>} : memref<72x768xf32, #tpu.memory_space<vmem>>, vector<8x768xf32>,
    %c0_3 = arith.constant 0 : index
    %c1 = arith.constant 1 : index
    %2 = vector.load %arg1[%c0_3, %c1] : memref<8x1152xf32, #tpu.memory_space<vmem>>, vector<8x768xf32>
    %c8 = arith.constant 8 : index
    %c0_4 = arith.constant 0 : index
    %3 = vector.load %arg7[%c8, %c0_4] : memref<72x768xf32, #tpu.memory_space<vmem>>, vector<8x768xf32>
    tpu.vector_store %arg7[%c8, %c0_4], %2 {strides = array<i32>} : memref<72x768xf32, #tpu.memory_space<vmem>>, vector<8x768xf32>,
    %c0_5 = arith.constant 0 : index
    %c2 = arith.constant 2 : index
    %4 = vector.load %arg1[%c0_5, %c2] : memref<8x1152xf32, #tpu.memory_space<vmem>>, vector<8x768xf32>
    %c16 = arith.constant 16 : index
    %c0_6 = arith.constant 0 : index
    %5 = vector.load %arg7[%c16, %c0_6] : memref<72x768xf32, #tpu.memory_space<vmem>>, vector<8x768xf32>
    tpu.vector_store %arg7[%c16, %c0_6], %4 {strides = array<i32>} : memref<72x768xf32, #tpu.memory_space<vmem>>, vector<8x768xf32>,
    %c0_7 = arith.constant 0 : index
    %c18 = arith.constant 18 : index
    %6 = vector.load %arg1[%c0_7, %c18] : memref<8x1152xf32, #tpu.memory_space<vmem>>, vector<8x768xf32>
    %c24 = arith.constant 24 : index
    %c0_8 = arith.constant 0 : index
    %7 = vector.load %arg7[%c24, %c0_8] : memref<72x768xf32, #tpu.memory_space<vmem>>, vector<8x768xf32>
    tpu.vector_store %arg7[%c24, %c0_8], %6 {strides = array<i32>} : memref<72x768xf32, #tpu.memory_space<vmem>>, vector<8x768xf32>,
    %c0_9 = arith.constant 0 : index
    %c19 = arith.constant 19 : index
    %8 = vector.load %arg1[%c0_9, %c19] : memref<8x1152xf32, #tpu.memory_space<vmem>>, vector<8x768xf32>
    %c32 = arith.constant 32 : index
    %c0_10 = arith.constant 0 : index
    %9 = vector.load %arg7[%c32, %c0_10] : memref<72x768xf32, #tpu.memory_space<vmem>>, vector<8x768xf32>
    tpu.vector_store %arg7[%c32, %c0_10], %8 {strides = array<i32>} : memref<72x768xf32, #tpu.memory_space<vmem>>, vector<8x768xf32>,
    %c0_11 = arith.constant 0 : index
    %c20 = arith.constant 20 : index
    %10 = vector.load %arg1[%c0_11, %c20] : memref<8x1152xf32, #tpu.memory_space<vmem>>, vector<8x768xf32>
    %c40 = arith.constant 40 : index
    %c0_12 = arith.constant 0 : index
    %11 = vector.load %arg7[%c40, %c0_12] : memref<72x768xf32, #tpu.memory_space<vmem>>, vector<8x768xf32>
    tpu.vector_store %arg7[%c40, %c0_12], %10 {strides = array<i32>} : memref<72x768xf32, #tpu.memory_space<vmem>>, vector<8x768xf32>,
    %c0_13 = arith.constant 0 : index
    %c36 = arith.constant 36 : index
    %12 = vector.load %arg1[%c0_13, %c36] : memref<8x1152xf32, #tpu.memory_space<vmem>>, vector<8x768xf32>
    %c48 = arith.constant 48 : index
    %c0_14 = arith.constant 0 : index
    %13 = vector.load %arg7[%c48, %c0_14] : memref<72x768xf32, #tpu.memory_space<vmem>>, vector<8x768xf32>
    tpu.vector_store %arg7[%c48, %c0_14], %12 {strides = array<i32>} : memref<72x768xf32, #tpu.memory_space<vmem>>, vector<8x768xf32>,
    %c0_15 = arith.constant 0 : index
    %c37 = arith.constant 37 : index
    %14 = vector.load %arg1[%c0_15, %c37] : memref<8x1152xf32, #tpu.memory_space<vmem>>, vector<8x768xf32>
    %c56 = arith.constant 56 : index
    %c0_16 = arith.constant 0 : index
    %15 = vector.load %arg7[%c56, %c0_16] : memref<72x768xf32, #tpu.memory_space<vmem>>, vector<8x768xf32>
    tpu.vector_store %arg7[%c56, %c0_16], %14 {strides = array<i32>} : memref<72x768xf32, #tpu.memory_space<vmem>>, vector<8x768xf32>,
    %c0_17 = arith.constant 0 : index
    %c38 = arith.constant 38 : index
    %16 = vector.load %arg1[%c0_17, %c38] : memref<8x1152xf32, #tpu.memory_space<vmem>>, vector<8x768xf32>
    %c64 = arith.constant 64 : index
    %c0_18 = arith.constant 0 : index
    %17 = vector.load %arg7[%c64, %c0_18] : memref<72x768xf32, #tpu.memory_space<vmem>>, vector<8x768xf32>
    tpu.vector_store %arg7[%c64, %c0_18], %16 {strides = array<i32>} : memref<72x768xf32, #tpu.memory_space<vmem>>, vector<8x768xf32>,
    %c0_19 = arith.constant 0 : index
    %c0_20 = arith.constant 0 : index
    %18 = vector.load %arg2[%c0_19, %c0_20] : memref<8x72xf32, #tpu.memory_space<vmem>>, vector<8x72xf32>
    %c0_21 = arith.constant 0 : index
    %c0_22 = arith.constant 0 : index
    %19 = vector.load %arg7[%c0_21, %c0_22] : memref<72x768xf32, #tpu.memory_space<vmem>>, vector<72x768xf32>
    %cst = arith.constant dense<0.000000e+00> : vector<8x768xf32>
    %20 = tpu.matmul %18, %19, %cst {dimension_numbers = #tpu.dot_dimension_numbers<[1], [0], [0], [1], [0, 0, 1, 1], [], []>} : vector<8x72xf32>, vector<72x768xf32>, vector<8x768xf32> -> vector<8x768xf32>
    %c0_23 = arith.constant 0 : index
    %c0_24 = arith.constant 0 : index
    %21 = vector.load %arg6[%c0_23, %c0_24] : memref<8x768xf32, #tpu.memory_space<vmem>>, vector<8x768xf32>
    tpu.vector_store %arg6[%c0_23, %c0_24], %20 {strides = array<i32>} : memref<8x768xf32, #tpu.memory_space<vmem>>, vector<8x768xf32>,
    %c0_25 = arith.constant 0 : index
    %c0_26 = arith.constant 0 : index
    %22 = vector.load %arg6[%c0_25, %c0_26] : memref<8x768xf32, #tpu.memory_space<vmem>>, vector<8x768xf32>
    %c0_27 = arith.constant 0 : index
    %c0_28 = arith.constant 0 : index
    %23 = vector.load %arg5[%c0_27, %c0_28] : memref<1x768xf32, #tpu.memory_space<vmem>>, vector<1x768xf32>
    %24 = vector.broadcast %23 : vector<1x768xf32> to vector<8x768xf32>
    %25 = arith.mulf %22, %24 : vector<8x768xf32>
    %cst_29 = arith.constant dense<0.000000e+00> : vector<8xf32>
    %26 = vector.multi_reduction <add>, %25, %cst_29 [1] : vector<8x768xf32> to vector<8xf32>
    %27 = vector.shape_cast %26 : vector<8xf32> to vector<8x1xf32>
    %28 = arith.mulf %25, %22 : vector<8x768xf32>
    %cst_30 = arith.constant dense<0.000000e+00> : vector<8xf32>
    %29 = vector.multi_reduction <add>, %28, %cst_30 [1] : vector<8x768xf32> to vector<8xf32>
    %30 = vector.shape_cast %29 : vector<8xf32> to vector<8x1xf32>
    %cst_31 = arith.constant 0.001953125 : f32
    %31 = vector.broadcast %cst_31 : f32 to vector<8x1xf32>
    %32 = arith.mulf %27, %31 : vector<8x1xf32>
    %cst_32 = arith.constant 0.001953125 : f32
    %33 = vector.broadcast %cst_32 : f32 to vector<8x1xf32>
    %34 = arith.mulf %30, %33 : vector<8x1xf32>
    %35 = arith.mulf %32, %32 : vector<8x1xf32>
    %36 = arith.subf %34, %35 : vector<8x1xf32>
    %cst_33 = arith.constant 0.000000e+00 : f32
    %37 = vector.broadcast %cst_33 : f32 to vector<8x1xf32>
    %38 = arith.maximumf %36, %37 : vector<8x1xf32>
    %c0_34 = arith.constant 0 : index
    %c0_35 = arith.constant 0 : index
    %39 = vector.load %arg3[%c0_34, %c0_35] : memref<8x1xf32, #tpu.memory_space<vmem>>, vector<8x1xf32>
    %cst_36 = arith.constant 9.99999974E-6 : f32
    %40 = vector.broadcast %cst_36 : f32 to vector<8x1xf32>
    %41 = arith.addf %38, %40 : vector<8x1xf32>
    %42 = math.rsqrt %41 : vector<8x1xf32>
    %43 = arith.mulf %39, %42 : vector<8x1xf32>
    %c0_37 = arith.constant 0 : index
    %c0_38 = arith.constant 0 : index
    %44 = vector.load %arg4[%c0_37, %c0_38] : memref<8x1xf32, #tpu.memory_space<vmem>>, vector<8x1xf32>
    %45 = arith.mulf %32, %43 : vector<8x1xf32>
    %46 = arith.subf %44, %45 : vector<8x1xf32>
    %47 = vector.broadcast %43 : vector<8x1xf32> to vector<8x768xf32>
    %48 = arith.mulf %22, %47 : vector<8x768xf32>
    %49 = vector.broadcast %46 : vector<8x1xf32> to vector<8x768xf32>
    %50 = arith.addf %48, %49 : vector<8x768xf32>
    %cst_39 = arith.constant 0.000000e+00 : f32
    %51 = vector.broadcast %cst_39 : f32 to vector<8x768xf32>
    %52 = arith.maximumf %50, %51 : vector<8x768xf32>
    %c0_40 = arith.constant 0 : index
    %c0_41 = arith.constant 0 : index
    %53 = vector.load %arg6[%c0_40, %c0_41] : memref<8x768xf32, #tpu.memory_space<vmem>>, vector<8x768xf32>
    tpu.vector_store %arg6[%c0_40, %c0_41], %52 {strides = array<i32>} : memref<8x768xf32, #tpu.memory_space<vmem>>, vector<8x768xf32>,
    return
  }
  func.func @transform_0(%arg0: i32) -> (i32, i32) {
    %c0_i32 = arith.constant 0 : i32
    %c0_i32_0 = arith.constant 0 : i32
    %c0_i32_1 = arith.constant 0 : i32
    return %c0_i32, %c0_i32_0 : i32, i32
  }
  func.func @transform_1(%arg0: i32) -> (i32, i32) {
    %c0_i32 = arith.constant 0 : i32
    %c0_i32_0 = arith.constant 0 : i32
    %c0_i32_1 = arith.constant 0 : i32
    return %c0_i32, %c0_i32_0 : i32, i32
  }
  func.func @transform_2(%arg0: i32) -> (i32, i32) {
    %c0_i32 = arith.constant 0 : i32
    %c0_i32_0 = arith.constant 0 : i32
    %c0_i32_1 = arith.constant 0 : i32
    return %c0_i32, %c0_i32_0 : i32, i32
  }
  func.func @transform_3(%arg0: i32) -> (i32, i32) {
    %c0_i32 = arith.constant 0 : i32
    %c0_i32_0 = arith.constant 0 : i32
    %c0_i32_1 = arith.constant 0 : i32
    return %c0_i32, %c0_i32_0 : i32, i32
  }
  func.func @transform_4(%arg0: i32) -> (i32, i32) {
    %c0_i32 = arith.constant 0 : i32
    %c0_i32_0 = arith.constant 0 : i32
    %c0_i32_1 = arith.constant 0 : i32
    return %c0_i32, %c0_i32_0 : i32, i32
  }
  func.func @transform_5(%arg0: i32) -> (i32, i32) {
    %c0_i32 = arith.constant 0 : i32
    %c0_i32_0 = arith.constant 0 : i32
    %c0_i32_1 = arith.constant 0 : i32
    return %c0_i32, %c0_i32_0 : i32, i32
  }
}

</mosaic_0001>

<llo_original>
// kernel: tpu_custom_call.1
$region0: #{tpu_custom_call.1}
  #allocation0 [shape = 'u32[]', space=smem, size = 0x4, offset = 0x4, fixed_abs, tag = 'smem constant byte address 0x4 - core index']
  #allocation1 [shape = 'u32[72,128]{1,0:T(1,128)}', space=vmem, size = 0x9000, scoped, tag = 'internal scratch']
  #allocation2 [shape = 'f32[72,768]{1,0:T(8,128)}', space=vmem, size = 0x36000, scoped, tag = 'scratch operand']
  %s0 = inlined_call_operand.hbm [shape: f32[8,1152], index: 0, kind: input, shape index: {}]
  %s1 = inlined_call_operand.vmem [shape: f32[8,72], index: 1, kind: input, shape index: {}]
  %s2 = inlined_call_operand.vmem [shape: f32[8,1], index: 2, kind: input, shape index: {}]
  %s3 = inlined_call_operand.vmem [shape: f32[8,1], index: 3, kind: input, shape index: {}]
  %s4 = inlined_call_operand.vmem [shape: f32[1,768], index: 4, kind: input, shape index: {}]
  %s5 = inlined_call_operand.hbm [shape: f32[8,768], index: 5, kind: output, shape index: {}]
  %s6 = sld [smem:[#allocation0]]
  $region34: #{tpu_custom_call.1} parent=0
    _
  %s8 = ssub.s32 1, %s6
  %s9 = scalar_select 0, %s8, %s6
  $region1: #{tpu_custom_call.1} parent=0
    #allocation3 [shape = 'u8[36864]{0}', space=vmem, size = 0x9000, scoped, tag = 'input window, operand 0, single buffered']
    #allocation4 [shape = 's32[1]{0}', space=sflag, size = 0x4, scoped, tag = 'scoped memory for tpu_custom_call.1']
    #allocation5 [shape = 's32[1]{0}', space=sflag, size = 0x4, scoped, tag = 'scoped memory for tpu_custom_call.1']
    #allocation6 [shape = 'u8[24576]{0}', space=vmem, size = 0x6000, scoped, tag = 'output window, operand 0, single buffered']
    %10 = vsyncpa [#allocation4], 0
    %11 = vsyncpa [#allocation5], 0
    // Predicated region
    $region2: #{tpu_custom_call.1} parent=1 // pred_check
      _
    $region3: #{tpu_custom_call.1} parent=1 // pred_check_branch
      %13 = sbr.rel (0) target = $region5
    $region4: #{tpu_custom_call.1} parent=1 // pred_region
      %15 = vsyncadd [#allocation4], 0
      %s17 = sshll.u32 %s0, 4
      %s18 = int_to_ptr.hbm [resolvable:$true] %s17
      %s19 = sshll.u32 [#allocation3], 4
      %s20 = int_to_ptr.vmem [resolvable:$true] %s19
      %22 = dma.hbm_to_vmem [thread:$0]  %s18, 1152, %s20, [#allocation4]
    $region5: #{tpu_custom_call.1} parent=1 // pred_fallthru
      _
    // Predicated region
    $region6: #{tpu_custom_call.1} parent=1 // pred_check
      _
    $region7: #{tpu_custom_call.1} parent=1 // pred_check_branch
      %24 = sbr.rel (0) target = $region9
    $region8: #{tpu_custom_call.1} parent=1 // pred_region
      _
    $region9: #{tpu_custom_call.1} parent=1 // pred_fallthru
      _
    // Predicated region
    $region10: #{tpu_custom_call.1} parent=1 // pred_check
      _
    $region11: #{tpu_custom_call.1} parent=1 // pred_check_branch
      %26 = sbr.rel (0) target = $region13
    $region12: #{tpu_custom_call.1} parent=1 // pred_region
      _
    $region13: #{tpu_custom_call.1} parent=1 // pred_fallthru
      _
    // Predicated region
    $region14: #{tpu_custom_call.1} parent=1 // pred_check
      _
    $region15: #{tpu_custom_call.1} parent=1 // pred_check_branch
      %28 = sbr.rel (0) target = $region17
    $region16: #{tpu_custom_call.1} parent=1 // pred_region
      _
    $region17: #{tpu_custom_call.1} parent=1 // pred_fallthru
      _
    // Predicated region
    $region18: #{tpu_custom_call.1} parent=1 // pred_check
      _
    $region19: #{tpu_custom_call.1} parent=1 // pred_check_branch
      %30 = sbr.rel (0) target = $region21
    $region20: #{tpu_custom_call.1} parent=1 // pred_region
      _
    $region21: #{tpu_custom_call.1} parent=1 // pred_fallthru
      _
    // Predicated region
    $region22: #{tpu_custom_call.1} parent=1 // pred_check
      _
    $region23: #{tpu_custom_call.1} parent=1 // pred_check_branch
      %32 = sbr.rel (0) target = $region25
    $region24: #{tpu_custom_call.1} parent=1 // pred_region
      %34 = dma.done [#allocation4], 1152
    $region25: #{tpu_custom_call.1} parent=1 // pred_fallthru
      _
    %v35 = vld [vmem:[#allocation3] sm:$0xff]
    %v36 = vld [vmem:[#allocation3 + $0x8] sm:$0xff]
    %v37 = vld [vmem:[#allocation3 + $0x10] sm:$0xff]
    %v38 = vld [vmem:[#allocation3 + $0x18] sm:$0xff]
    %v39 = vld [vmem:[#allocation3 + $0x20] sm:$0xff]
    %v40 = vld [vmem:[#allocation3 + $0x28] sm:$0xff]
    %41 = vst [vmem:[#allocation2] sm:$0xff] %v35
    %42 = vst [vmem:[#allocation2 + $0x8] sm:$0xff] %v36
    %43 = vst [vmem:[#allocation2 + $0x10] sm:$0xff] %v37
    %44 = vst [vmem:[#allocation2 + $0x18] sm:$0xff] %v38
    %45 = vst [vmem:[#allocation2 + $0x20] sm:$0xff] %v39
    %46 = vst [vmem:[#allocation2 + $0x28] sm:$0xff] %v40
    %v47 = vld [vmem:[#allocation3] sm:$0xff]
    %v48 = vld [vmem:[#allocation3 + $0x8] sm:$0xff]
    %v49 = vld [vmem:[#allocation3 + $0x10] sm:$0xff]
    %v50 = vld [vmem:[#allocation3 + $0x18] sm:$0xff]
    %v51 = vld [vmem:[#allocation3 + $0x20] sm:$0xff]
    %v52 = vld [vmem:[#allocation3 + $0x28] sm:$0xff]
    %v53 = vld [vmem:[#allocation3 + $0x30] sm:$0xff]
    %61 = vrot.lane.b32.xlu0 %v47, 127
    %v62 = vpop.permute.xlu0 %61
    %63 = vrot.lane.b32.xlu0 %v48, 127
    %v64 = vpop.permute.xlu0 %63
    %65 = vrot.lane.b32.xlu0 %v49, 127
    %v66 = vpop.permute.xlu0 %65
    %67 = vrot.lane.b32.xlu0 %v50, 127
    %v68 = vpop.permute.xlu0 %67
    %69 = vrot.lane.b32.xlu0 %v51, 127
    %v70 = vpop.permute.xlu0 %69
    %71 = vrot.lane.b32.xlu0 %v52, 127
    %v72 = vpop.permute.xlu0 %71
    %73 = vrot.lane.b32.xlu0 %v53, 127
    %v74 = vpop.permute.xlu0 %73
    %vm75 = vcmask 1039360
    %v76 = vsel %vm75, %v62, %v64
    %v77 = vsel %vm75, %v64, %v66
    %v78 = vsel %vm75, %v66, %v68
    %v79 = vsel %vm75, %v68, %v70
    %v80 = vsel %vm75, %v70, %v72
    %v81 = vsel %vm75, %v72, %v74
    %88 = vst [vmem:[#allocation2 + $0x30] sm:$0xff] %v76
    %89 = vst [vmem:[#allocation2 + $0x38] sm:$0xff] %v77
    %90 = vst [vmem:[#allocation2 + $0x40] sm:$0xff] %v78
    %91 = vst [vmem:[#allocation2 + $0x48] sm:$0xff] %v79
    %92 = vst [vmem:[#allocation2 + $0x50] sm:$0xff] %v80
    %93 = vst [vmem:[#allocation2 + $0x58] sm:$0xff] %v81
    %v94 = vld [vmem:[#allocation3] sm:$0xff]
    %v95 = vld [vmem:[#allocation3 + $0x8] sm:$0xff]
    %v96 = vld [vmem:[#allocation3 + $0x10] sm:$0xff]
    %v97 = vld [vmem:[#allocation3 + $0x18] sm:$0xff]
    %v98 = vld [vmem:[#allocation3 + $0x20] sm:$0xff]
    %v99 = vld [vmem:[#allocation3 + $0x28] sm:$0xff]
    %v100 = vld [vmem:[#allocation3 + $0x30] sm:$0xff]
    %108 = vrot.lane.b32.xlu0 %v94, 126
    %v109 = vpop.permute.xlu0 %108
    %110 = vrot.lane.b32.xlu0 %v95, 126
    %v111 = vpop.permute.xlu0 %110
    %112 = vrot.lane.b32.xlu0 %v96, 126
    %v113 = vpop.permute.xlu0 %112
    %114 = vrot.lane.b32.xlu0 %v97, 126
    %v115 = vpop.permute.xlu0 %114
    %116 = vrot.lane.b32.xlu0 %v98, 126
    %v117 = vpop.permute.xlu0 %116
    %118 = vrot.lane.b32.xlu0 %v99, 126
    %v119 = vpop.permute.xlu0 %118
    %120 = vrot.lane.b32.xlu0 %v100, 126
    %v121 = vpop.permute.xlu0 %120
    %vm122 = vcmask 1031168
    %v123 = vsel %vm122, %v109, %v111
    %v124 = vsel %vm122, %v111, %v113
    %v125 = vsel %vm122, %v113, %v115
    %v126 = vsel %vm122, %v115, %v117
    %v127 = vsel %vm122, %v117, %v119
    %v128 = vsel %vm122, %v119, %v121
    %135 = vst [vmem:[#allocation2 + $0x60] sm:$0xff] %v123
    %136 = vst [vmem:[#allocation2 + $0x68] sm:$0xff] %v124
    %137 = vst [vmem:[#allocation2 + $0x70] sm:$0xff] %v125
    %138 = vst [vmem:[#allocation2 + $0x78] sm:$0xff] %v126
    %139 = vst [vmem:[#allocation2 + $0x80] sm:$0xff] %v127
    %140 = vst [vmem:[#allocation2 + $0x88] sm:$0xff] %v128
    %v141 = vld [vmem:[#allocation3] sm:$0xff]
    %v142 = vld [vmem:[#allocation3 + $0x8] sm:$0xff]
    %v143 = vld [vmem:[#allocation3 + $0x10] sm:$0xff]
    %v144 = vld [vmem:[#allocation3 + $0x18] sm:$0xff]
    %v145 = vld [vmem:[#allocation3 + $0x20] sm:$0xff]
    %v146 = vld [vmem:[#allocation3 + $0x28] sm:$0xff]
    %v147 = vld [vmem:[#allocation3 + $0x30] sm:$0xff]
    %155 = vrot.lane.b32.xlu0 %v141, 110
    %v156 = vpop.permute.xlu0 %155
    %157 = vrot.lane.b32.xlu0 %v142, 110
    %v158 = vpop.permute.xlu0 %157
    %159 = vrot.lane.b32.xlu0 %v143, 110
    %v160 = vpop.permute.xlu0 %159
    %161 = vrot.lane.b32.xlu0 %v144, 110
    %v162 = vpop.permute.xlu0 %161
    %163 = vrot.lane.b32.xlu0 %v145, 110
    %v164 = vpop.permute.xlu0 %163
    %165 = vrot.lane.b32.xlu0 %v146, 110
    %v166 = vpop.permute.xlu0 %165
    %167 = vrot.lane.b32.xlu0 %v147, 110
    %v168 = vpop.permute.xlu0 %167
    %vm169 = vcmask 900096
    %v170 = vsel %vm169, %v156, %v158
    %v171 = vsel %vm169, %v158, %v160
    %v172 = vsel %vm169, %v160, %v162
    %v173 = vsel %vm169, %v162, %v164
    %v174 = vsel %vm169, %v164, %v166
    %v175 = vsel %vm169, %v166, %v168
    %182 = vst [vmem:[#allocation2 + $0x90] sm:$0xff] %v170
    %183 = vst [vmem:[#allocation2 + $0x98] sm:$0xff] %v171
    %184 = vst [vmem:[#allocation2 + $0xa0] sm:$0xff] %v172
    %185 = vst [vmem:[#allocation2 + $0xa8] sm:$0xff] %v173
    %186 = vst [vmem:[#allocation2 + $0xb0] sm:$0xff] %v174
    %187 = vst [vmem:[#allocation2 + $0xb8] sm:$0xff] %v175
    %v188 = vld [vmem:[#allocation3] sm:$0xff]
    %v189 = vld [vmem:[#allocation3 + $0x8] sm:$0xff]
    %v190 = vld [vmem:[#allocation3 + $0x10] sm:$0xff]
    %v191 = vld [vmem:[#allocation3 + $0x18] sm:$0xff]
    %v192 = vld [vmem:[#allocation3 + $0x20] sm:$0xff]
    %v193 = vld [vmem:[#allocation3 + $0x28] sm:$0xff]
    %v194 = vld [vmem:[#allocation3 + $0x30] sm:$0xff]
    %202 = vrot.lane.b32.xlu0 %v188, 109
    %v203 = vpop.permute.xlu0 %202
    %204 = vrot.lane.b32.xlu0 %v189, 109
    %v205 = vpop.permute.xlu0 %204
    %206 = vrot.lane.b32.xlu0 %v190, 109
    %v207 = vpop.permute.xlu0 %206
    %208 = vrot.lane.b32.xlu0 %v191, 109
    %v209 = vpop.permute.xlu0 %208
    %210 = vrot.lane.b32.xlu0 %v192, 109
    %v211 = vpop.permute.xlu0 %210
    %212 = vrot.lane.b32.xlu0 %v193, 109
    %v213 = vpop.permute.xlu0 %212
    %214 = vrot.lane.b32.xlu0 %v194, 109
    %v215 = vpop.permute.xlu0 %214
    %vm216 = vcmask 891904
    %v217 = vsel %vm216, %v203, %v205
    %v218 = vsel %vm216, %v205, %v207
    %v219 = vsel %vm216, %v207, %v209
    %v220 = vsel %vm216, %v209, %v211
    %v221 = vsel %vm216, %v211, %v213
    %v222 = vsel %vm216, %v213, %v215
    %229 = vst [vmem:[#allocation2 + $0xc0] sm:$0xff] %v217
    %230 = vst [vmem:[#allocation2 + $0xc8] sm:$0xff] %v218
    %231 = vst [vmem:[#allocation2 + $0xd0] sm:$0xff] %v219
    %232 = vst [vmem:[#allocation2 + $0xd8] sm:$0xff] %v220
    %233 = vst [vmem:[#allocation2 + $0xe0] sm:$0xff] %v221
    %234 = vst [vmem:[#allocation2 + $0xe8] sm:$0xff] %v222
    %v235 = vld [vmem:[#allocation3] sm:$0xff]
    %v236 = vld [vmem:[#allocation3 + $0x8] sm:$0xff]
    %v237 = vld [vmem:[#allocation3 + $0x10] sm:$0xff]
    %v238 = vld [vmem:[#allocation3 + $0x18] sm:$0xff]
    %v239 = vld [vmem:[#allocation3 + $0x20] sm:$0xff]
    %v240 = vld [vmem:[#allocation3 + $0x28] sm:$0xff]
    %v241 = vld [vmem:[#allocation3 + $0x30] sm:$0xff]
    %249 = vrot.lane.b32.xlu0 %v235, 108
    %v250 = vpop.permute.xlu0 %249
    %251 = vrot.lane.b32.xlu0 %v236, 108
    %v252 = vpop.permute.xlu0 %251
    %253 = vrot.lane.b32.xlu0 %v237, 108
    %v254 = vpop.permute.xlu0 %253
    %255 = vrot.lane.b32.xlu0 %v238, 108
    %v256 = vpop.permute.xlu0 %255
    %257 = vrot.lane.b32.xlu0 %v239, 108
    %v258 = vpop.permute.xlu0 %257
    %259 = vrot.lane.b32.xlu0 %v240, 108
    %v260 = vpop.permute.xlu0 %259
    %261 = vrot.lane.b32.xlu0 %v241, 108
    %v262 = vpop.permute.xlu0 %261
    %vm263 = vcmask 883712
    %v264 = vsel %vm263, %v250, %v252
    %v265 = vsel %vm263, %v252, %v254
    %v266 = vsel %vm263, %v254, %v256
    %v267 = vsel %vm263, %v256, %v258
    %v268 = vsel %vm263, %v258, %v260
    %v269 = vsel %vm263, %v260, %v262
    %276 = vst [vmem:[#allocation2 + $0xf0] sm:$0xff] %v264
    %277 = vst [vmem:[#allocation2 + $0xf8] sm:$0xff] %v265
    %278 = vst [vmem:[#allocation2 + $0x100] sm:$0xff] %v266
    %279 = vst [vmem:[#allocation2 + $0x108] sm:$0xff] %v267
    %280 = vst [vmem:[#allocation2 + $0x110] sm:$0xff] %v268
    %281 = vst [vmem:[#allocation2 + $0x118] sm:$0xff] %v269
    %v282 = vld [vmem:[#allocation3] sm:$0xff]
    %v283 = vld [vmem:[#allocation3 + $0x8] sm:$0xff]
    %v284 = vld [vmem:[#allocation3 + $0x10] sm:$0xff]
    %v285 = vld [vmem:[#allocation3 + $0x18] sm:$0xff]
    %v286 = vld [vmem:[#allocation3 + $0x20] sm:$0xff]
    %v287 = vld [vmem:[#allocation3 + $0x28] sm:$0xff]
    %v288 = vld [vmem:[#allocation3 + $0x30] sm:$0xff]
    %296 = vrot.lane.b32.xlu0 %v282, 92
    %v297 = vpop.permute.xlu0 %296
    %298 = vrot.lane.b32.xlu0 %v283, 92
    %v299 = vpop.permute.xlu0 %298
    %300 = vrot.lane.b32.xlu0 %v284, 92
    %v301 = vpop.permute.xlu0 %300
    %302 = vrot.lane.b32.xlu0 %v285, 92
    %v303 = vpop.permute.xlu0 %302
    %304 = vrot.lane.b32.xlu0 %v286, 92
    %v305 = vpop.permute.xlu0 %304
    %306 = vrot.lane.b32.xlu0 %v287, 92
    %v307 = vpop.permute.xlu0 %306
    %308 = vrot.lane.b32.xlu0 %v288, 92
    %v309 = vpop.permute.xlu0 %308
    %vm310 = vcmask 752640
    %v311 = vsel %vm310, %v297, %v299
    %v312 = vsel %vm310, %v299, %v301
    %v313 = vsel %vm310, %v301, %v303
    %v314 = vsel %vm310, %v303, %v305
    %v315 = vsel %vm310, %v305, %v307
    %v316 = vsel %vm310, %v307, %v309
    %323 = vst [vmem:[#allocation2 + $0x120] sm:$0xff] %v311
    %324 = vst [vmem:[#allocation2 + $0x128] sm:$0xff] %v312
    %325 = vst [vmem:[#allocation2 + $0x130] sm:$0xff] %v313
    %326 = vst [vmem:[#allocation2 + $0x138] sm:$0xff] %v314
    %327 = vst [vmem:[#allocation2 + $0x140] sm:$0xff] %v315
    %328 = vst [vmem:[#allocation2 + $0x148] sm:$0xff] %v316
    %v329 = vld [vmem:[#allocation3] sm:$0xff]
    %v330 = vld [vmem:[#allocation3 + $0x8] sm:$0xff]
    %v331 = vld [vmem:[#allocation3 + $0x10] sm:$0xff]
    %v332 = vld [vmem:[#allocation3 + $0x18] sm:$0xff]
    %v333 = vld [vmem:[#allocation3 + $0x20] sm:$0xff]
    %v334 = vld [vmem:[#allocation3 + $0x28] sm:$0xff]
    %v335 = vld [vmem:[#allocation3 + $0x30] sm:$0xff]
    %343 = vrot.lane.b32.xlu0 %v329, 91
    %v344 = vpop.permute.xlu0 %343
    %345 = vrot.lane.b32.xlu0 %v330, 91
    %v346 = vpop.permute.xlu0 %345
    %347 = vrot.lane.b32.xlu0 %v331, 91
    %v348 = vpop.permute.xlu0 %347
    %349 = vrot.lane.b32.xlu0 %v332, 91
    %v350 = vpop.permute.xlu0 %349
    %351 = vrot.lane.b32.xlu0 %v333, 91
    %v352 = vpop.permute.xlu0 %351
    %353 = vrot.lane.b32.xlu0 %v334, 91
    %v354 = vpop.permute.xlu0 %353
    %355 = vrot.lane.b32.xlu0 %v335, 91
    %v356 = vpop.permute.xlu0 %355
    %vm357 = vcmask 744448
    %v358 = vsel %vm357, %v344, %v346
    %v359 = vsel %vm357, %v346, %v348
    %v360 = vsel %vm357, %v348, %v350
    %v361 = vsel %vm357, %v350, %v352
    %v362 = vsel %vm357, %v352, %v354
    %v363 = vsel %vm357, %v354, %v356
    %370 = vst [vmem:[#allocation2 + $0x150] sm:$0xff] %v358
    %371 = vst [vmem:[#allocation2 + $0x158] sm:$0xff] %v359
    %372 = vst [vmem:[#allocation2 + $0x160] sm:$0xff] %v360
    %373 = vst [vmem:[#allocation2 + $0x168] sm:$0xff] %v361
    %374 = vst [vmem:[#allocation2 + $0x170] sm:$0xff] %v362
    %375 = vst [vmem:[#allocation2 + $0x178] sm:$0xff] %v363
    %v376 = vld [vmem:[#allocation3] sm:$0xff]
    %v377 = vld [vmem:[#allocation3 + $0x8] sm:$0xff]
    %v378 = vld [vmem:[#allocation3 + $0x10] sm:$0xff]
    %v379 = vld [vmem:[#allocation3 + $0x18] sm:$0xff]
    %v380 = vld [vmem:[#allocation3 + $0x20] sm:$0xff]
    %v381 = vld [vmem:[#allocation3 + $0x28] sm:$0xff]
    %v382 = vld [vmem:[#allocation3 + $0x30] sm:$0xff]
    %390 = vrot.lane.b32.xlu0 %v376, 90
    %v391 = vpop.permute.xlu0 %390
    %392 = vrot.lane.b32.xlu0 %v377, 90
    %v393 = vpop.permute.xlu0 %392
    %394 = vrot.lane.b32.xlu0 %v378, 90
    %v395 = vpop.permute.xlu0 %394
    %396 = vrot.lane.b32.xlu0 %v379, 90
    %v397 = vpop.permute.xlu0 %396
    %398 = vrot.lane.b32.xlu0 %v380, 90
    %v399 = vpop.permute.xlu0 %398
    %400 = vrot.lane.b32.xlu0 %v381, 90
    %v401 = vpop.permute.xlu0 %400
    %402 = vrot.lane.b32.xlu0 %v382, 90
    %v403 = vpop.permute.xlu0 %402
    %vm404 = vcmask 736256
    %v405 = vsel %vm404, %v391, %v393
    %v406 = vsel %vm404, %v393, %v395
    %v407 = vsel %vm404, %v395, %v397
    %v408 = vsel %vm404, %v397, %v399
    %v409 = vsel %vm404, %v399, %v401
    %v410 = vsel %vm404, %v401, %v403
    %417 = vst [vmem:[#allocation2 + $0x180] sm:$0xff] %v405
    %418 = vst [vmem:[#allocation2 + $0x188] sm:$0xff] %v406
    %419 = vst [vmem:[#allocation2 + $0x190] sm:$0xff] %v407
    %420 = vst [vmem:[#allocation2 + $0x198] sm:$0xff] %v408
    %421 = vst [vmem:[#allocation2 + $0x1a0] sm:$0xff] %v409
    %422 = vst [vmem:[#allocation2 + $0x1a8] sm:$0xff] %v410
    %v423 = vld [vmem:[%s1] sm:$0xff]
    %v424 = vld [vmem:[#allocation2] sm:$0xff]
    %v425 = vld [vmem:[#allocation2 + $0x8] sm:$0xff]
    %v426 = vld [vmem:[#allocation2 + $0x10] sm:$0xff]
    %v427 = vld [vmem:[#allocation2 + $0x18] sm:$0xff]
    %v428 = vld [vmem:[#allocation2 + $0x20] sm:$0xff]
    %v429 = vld [vmem:[#allocation2 + $0x28] sm:$0xff]
    %v430 = vld [vmem:[#allocation2 + $0x30] sm:$0xff]
    %v431 = vld [vmem:[#allocation2 + $0x38] sm:$0xff]
    %v432 = vld [vmem:[#allocation2 + $0x40] sm:$0xff]
    %v433 = vld [vmem:[#allocation2 + $0x48] sm:$0xff]
    %v434 = vld [vmem:[#allocation2 + $0x50] sm:$0xff]
    %v435 = vld [vmem:[#allocation2 + $0x58] sm:$0xff]
    %v436 = vld [vmem:[#allocation2 + $0x60] sm:$0xff]
    %v437 = vld [vmem:[#allocation2 + $0x68] sm:$0xff]
    %v438 = vld [vmem:[#allocation2 + $0x70] sm:$0xff]
    %v439 = vld [vmem:[#allocation2 + $0x78] sm:$0xff]
    %v440 = vld [vmem:[#allocation2 + $0x80] sm:$0xff]
    %v441 = vld [vmem:[#allocation2 + $0x88] sm:$0xff]
    %v442 = vld [vmem:[#allocation2 + $0x90] sm:$0xff]
    %v443 = vld [vmem:[#allocation2 + $0x98] sm:$0xff]
    %v444 = vld [vmem:[#allocation2 + $0xa0] sm:$0xff]
    %v445 = vld [vmem:[#allocation2 + $0xa8] sm:$0xff]
    %v446 = vld [vmem:[#allocation2 + $0xb0] sm:$0xff]
    %v447 = vld [vmem:[#allocation2 + $0xb8] sm:$0xff]
    %v448 = vld [vmem:[#allocation2 + $0xc0] sm:$0xff]
    %v449 = vld [vmem:[#allocation2 + $0xc8] sm:$0xff]
    %v450 = vld [vmem:[#allocation2 + $0xd0] sm:$0xff]
    %v451 = vld [vmem:[#allocation2 + $0xd8] sm:$0xff]
    %v452 = vld [vmem:[#allocation2 + $0xe0] sm:$0xff]
    %v453 = vld [vmem:[#allocation2 + $0xe8] sm:$0xff]
    %v454 = vld [vmem:[#allocation2 + $0xf0] sm:$0xff]
    %v455 = vld [vmem:[#allocation2 + $0xf8] sm:$0xff]
    %v456 = vld [vmem:[#allocation2 + $0x100] sm:$0xff]
    %v457 = vld [vmem:[#allocation2 + $0x108] sm:$0xff]
    %v458 = vld [vmem:[#allocation2 + $0x110] sm:$0xff]
    %v459 = vld [vmem:[#allocation2 + $0x118] sm:$0xff]
    %v460 = vld [vmem:[#allocation2 + $0x120] sm:$0xff]
    %v461 = vld [vmem:[#allocation2 + $0x128] sm:$0xff]
    %v462 = vld [vmem:[#allocation2 + $0x130] sm:$0xff]
    %v463 = vld [vmem:[#allocation2 + $0x138] sm:$0xff]
    %v464 = vld [vmem:[#allocation2 + $0x140] sm:$0xff]
    %v465 = vld [vmem:[#allocation2 + $0x148] sm:$0xff]
    %v466 = vld [vmem:[#allocation2 + $0x150] sm:$0xff]
    %v467 = vld [vmem:[#allocation2 + $0x158] sm:$0xff]
    %v468 = vld [vmem:[#allocation2 + $0x160] sm:$0xff]
    %v469 = vld [vmem:[#allocation2 + $0x168] sm:$0xff]
    %v470 = vld [vmem:[#allocation2 + $0x170] sm:$0xff]
    %v471 = vld [vmem:[#allocation2 + $0x178] sm:$0xff]
    %v472 = vld [vmem:[#allocation2 + $0x180] sm:$0xff]
    %v473 = vld [vmem:[#allocation2 + $0x188] sm:$0xff]
    %v474 = vld [vmem:[#allocation2 + $0x190] sm:$0xff]
    %v475 = vld [vmem:[#allocation2 + $0x198] sm:$0xff]
    %v476 = vld [vmem:[#allocation2 + $0x1a0] sm:$0xff]
    %v477 = vld [vmem:[#allocation2 + $0x1a8] sm:$0xff]
    %vm478 = vcmask 588800
    %v480 = vsel %vm478, %v423, 0
    %482 = vmatpush.msra.mxu0 0.0
    %483 = vmatpush.msra.mxu0 0.0
    %484 = vmatpush.msra.mxu0 0.0
    %485 = vmatpush.msra.mxu0 0.0
    %486 = vmatpush.msra.mxu0 0.0
    %487 = vmatpush.msra.mxu0 0.0
    %488 = vmatpush.msra.mxu0 0.0
    %489 = vmatpush.msra.mxu0 %v472
    %490 = vmatpush.msra.mxu0 %v466
    %491 = vmatpush.msra.mxu0 %v460
    %492 = vmatpush.msra.mxu0 %v454
    %493 = vmatpush.msra.mxu0 %v448
    %494 = vmatpush.msra.mxu0 %v442
    %495 = vmatpush.msra.mxu0 %v436
    %496 = vmatpush.msra.mxu0 %v430
    %497 = vmatpush.msra.mxu0 %v424
    %498 = vmatmul.f32.gmra.mxu0 %v480
    %v499 = vpop.f32.mrf.mxu0
    %v500 = vadd.f32 0.0, %v499
    %501 = vdwg.mxu0
    %502 = vmatpush.msra.mxu0 0.0
    %503 = vmatpush.msra.mxu0 0.0
    %504 = vmatpush.msra.mxu0 0.0
    %505 = vmatpush.msra.mxu0 0.0
    %506 = vmatpush.msra.mxu0 0.0
    %507 = vmatpush.msra.mxu0 0.0
    %508 = vmatpush.msra.mxu0 0.0
    %509 = vmatpush.msra.mxu0 %v473
    %510 = vmatpush.msra.mxu0 %v467
    %511 = vmatpush.msra.mxu0 %v461
    %512 = vmatpush.msra.mxu0 %v455
    %513 = vmatpush.msra.mxu0 %v449
    %514 = vmatpush.msra.mxu0 %v443
    %515 = vmatpush.msra.mxu0 %v437
    %516 = vmatpush.msra.mxu0 %v431
    %517 = vmatpush.msra.mxu0 %v425
    %518 = vmatmul.f32.gmra.mxu0 %v480
    %v519 = vpop.f32.mrf.mxu0
    %v520 = vadd.f32 0.0, %v519
    %521 = vdwg.mxu0
    %522 = vmatpush.msra.mxu0 0.0
    %523 = vmatpush.msra.mxu0 0.0
    %524 = vmatpush.msra.mxu0 0.0
    %525 = vmatpush.msra.mxu0 0.0
    %526 = vmatpush.msra.mxu0 0.0
    %527 = vmatpush.msra.mxu0 0.0
    %528 = vmatpush.msra.mxu0 0.0
    %529 = vmatpush.msra.mxu0 %v474
    %530 = vmatpush.msra.mxu0 %v468
    %531 = vmatpush.msra.mxu0 %v462
    %532 = vmatpush.msra.mxu0 %v456
    %533 = vmatpush.msra.mxu0 %v450
    %534 = vmatpush.msra.mxu0 %v444
    %535 = vmatpush.msra.mxu0 %v438
    %536 = vmatpush.msra.mxu0 %v432
    %537 = vmatpush.msra.mxu0 %v426
    %538 = vmatmul.f32.gmra.mxu0 %v480
    %v539 = vpop.f32.mrf.mxu0
    %v540 = vadd.f32 0.0, %v539
    %541 = vdwg.mxu0
    %542 = vmatpush.msra.mxu0 0.0
    %543 = vmatpush.msra.mxu0 0.0
    %544 = vmatpush.msra.mxu0 0.0
    %545 = vmatpush.msra.mxu0 0.0
    %546 = vmatpush.msra.mxu0 0.0
    %547 = vmatpush.msra.mxu0 0.0
    %548 = vmatpush.msra.mxu0 0.0
    %549 = vmatpush.msra.mxu0 %v475
    %550 = vmatpush.msra.mxu0 %v469
    %551 = vmatpush.msra.mxu0 %v463
    %552 = vmatpush.msra.mxu0 %v457
    %553 = vmatpush.msra.mxu0 %v451
    %554 = vmatpush.msra.mxu0 %v445
    %555 = vmatpush.msra.mxu0 %v439
    %556 = vmatpush.msra.mxu0 %v433
    %557 = vmatpush.msra.mxu0 %v427
    %558 = vmatmul.f32.gmra.mxu0 %v480
    %v559 = vpop.f32.mrf.mxu0
    %v560 = vadd.f32 0.0, %v559
    %561 = vdwg.mxu0
    %562 = vmatpush.msra.mxu0 0.0
    %563 = vmatpush.msra.mxu0 0.0
    %564 = vmatpush.msra.mxu0 0.0
    %565 = vmatpush.msra.mxu0 0.0
    %566 = vmatpush.msra.mxu0 0.0
    %567 = vmatpush.msra.mxu0 0.0
    %568 = vmatpush.msra.mxu0 0.0
    %569 = vmatpush.msra.mxu0 %v476
    %570 = vmatpush.msra.mxu0 %v470
    %571 = vmatpush.msra.mxu0 %v464
    %572 = vmatpush.msra.mxu0 %v458
    %573 = vmatpush.msra.mxu0 %v452
    %574 = vmatpush.msra.mxu0 %v446
    %575 = vmatpush.msra.mxu0 %v440
    %576 = vmatpush.msra.mxu0 %v434
    %577 = vmatpush.msra.mxu0 %v428
    %578 = vmatmul.f32.gmra.mxu0 %v480
    %v579 = vpop.f32.mrf.mxu0
    %v580 = vadd.f32 0.0, %v579
    %581 = vdwg.mxu0
    %582 = vmatpush.msra.mxu0 0.0
    %583 = vmatpush.msra.mxu0 0.0
    %584 = vmatpush.msra.mxu0 0.0
    %585 = vmatpush.msra.mxu0 0.0
    %586 = vmatpush.msra.mxu0 0.0
    %587 = vmatpush.msra.mxu0 0.0
    %588 = vmatpush.msra.mxu0 0.0
    %589 = vmatpush.msra.mxu0 %v477
    %590 = vmatpush.msra.mxu0 %v471
    %591 = vmatpush.msra.mxu0 %v465
    %592 = vmatpush.msra.mxu0 %v459
    %593 = vmatpush.msra.mxu0 %v453
    %594 = vmatpush.msra.mxu0 %v447
    %595 = vmatpush.msra.mxu0 %v441
    %596 = vmatpush.msra.mxu0 %v435
    %597 = vmatpush.msra.mxu0 %v429
    %598 = vmatmul.f32.gmra.mxu0 %v480
    %v599 = vpop.f32.mrf.mxu0
    %v600 = vadd.f32 0.0, %v599
    %601 = vdwg.mxu0
    %602 = vst [vmem:[#allocation6] sm:$0xff] %v500
    %603 = vst [vmem:[#allocation6 + $0x8] sm:$0xff] %v520
    %604 = vst [vmem:[#allocation6 + $0x10] sm:$0xff] %v540
    %605 = vst [vmem:[#allocation6 + $0x18] sm:$0xff] %v560
    %606 = vst [vmem:[#allocation6 + $0x20] sm:$0xff] %v580
    %607 = vst [vmem:[#allocation6 + $0x28] sm:$0xff] %v600
    %v608 = vld [vmem:[#allocation6] sm:$0xff]
    %v609 = vld [vmem:[#allocation6 + $0x8] sm:$0xff]
    %v610 = vld [vmem:[#allocation6 + $0x10] sm:$0xff]
    %v611 = vld [vmem:[#allocation6 + $0x18] sm:$0xff]
    %v612 = vld [vmem:[#allocation6 + $0x20] sm:$0xff]
    %v613 = vld [vmem:[#allocation6 + $0x28] sm:$0xff]
    %v614 = vld [vmem:[%s4] sm:$0x3f]
    %v616 = vperm.slane %v614, 0
    %v617 = vperm.slane %v614, 1
    %v618 = vperm.slane %v614, 2
    %v619 = vperm.slane %v614, 3
    %v620 = vperm.slane %v614, 4
    %v621 = vperm.slane %v614, 5
    %v628 = vmul.f32 %v608, %v616
    %v629 = vmul.f32 %v609, %v617
    %v630 = vmul.f32 %v610, %v618
    %v631 = vmul.f32 %v611, %v619
    %v632 = vmul.f32 %v612, %v620
    %v633 = vmul.f32 %v613, %v621
    %v634 = vadd.f32 %v628, %v629
    %v635 = vadd.f32 %v634, %v630
    %v636 = vadd.f32 %v635, %v631
    %v637 = vadd.f32 %v636, %v632
    %v638 = vadd.f32 %v637, %v633
    %639 = vadd.xlane.f32.xlu0 %v638
    %v640 = vpop.xlane.xlu0 %639
    %v641 = vmul.f32 %v628, %v608
    %v642 = vmul.f32 %v629, %v609
    %v643 = vmul.f32 %v630, %v610
    %v644 = vmul.f32 %v631, %v611
    %v645 = vmul.f32 %v632, %v612
    %v646 = vmul.f32 %v633, %v613
    %v647 = vadd.f32 %v641, %v642
    %v648 = vadd.f32 %v647, %v643
    %v649 = vadd.f32 %v648, %v644
    %v650 = vadd.f32 %v649, %v645
    %v651 = vadd.f32 %v650, %v646
    %652 = vadd.xlane.f32.xlu0 %v651
    %v653 = vpop.xlane.xlu0 %652
    %v654 = vmul.f32 %v640, 0.001953125
    %v655 = vmul.f32 %v653, 0.001953125
    %v656 = vmul.f32 %v654, %v654
    %v657 = vsub.f32 %v655, %v656
    %v658 = vmax.f32 %v657, 0.0
    %v659 = vld [vmem:[%s2] sm:$0xff]
    %v660 = vadd.f32 %v658, 1e-05
    %v661 = vrsqrt.pop %v660
    %v662 = vmul.f32 %v661, %v660
    %v663 = vmul.f32 %v662, %v661
    %v664 = vmul.f32 0.5, %v663
    %v665 = vsub.f32 1.5, %v664
    %v666 = vmul.f32 %v661, %v665
    %vm667 = vweird.f32 %v660
    %vm668 = vweird.f32 %v661
    %vm669 = vmor %vm667, %vm668
    %v670 = vsel %vm669, %v661, %v666
    %v671 = vmul.f32 %v659, %v670
    %v672 = vld [vmem:[%s3] sm:$0xff]
    %v673 = vmul.f32 %v654, %v671
    %v674 = vsub.f32 %v672, %v673
    %676 = vset.pattern.permute.xlu0 0
    %677 = vperm.xlu0 %676, %v671
    %v678 = vpop.permute.xlu0 %677
    %v680 = vmul.f32 %v608, %v678
    %v681 = vmul.f32 %v609, %v678
    %v682 = vmul.f32 %v610, %v678
    %v683 = vmul.f32 %v611, %v678
    %v684 = vmul.f32 %v612, %v678
    %v685 = vmul.f32 %v613, %v678
    %687 = vset.pattern.permute.xlu0 0
    %688 = vperm.xlu0 %687, %v674
    %v689 = vpop.permute.xlu0 %688
    %v691 = vadd.f32 %v680, %v689
    %v692 = vadd.f32 %v681, %v689
    %v693 = vadd.f32 %v682, %v689
    %v694 = vadd.f32 %v683, %v689
    %v695 = vadd.f32 %v684, %v689
    %v696 = vadd.f32 %v685, %v689
    %v697 = vmax.f32 %v691, 0.0
    %v698 = vmax.f32 %v692, 0.0
    %v699 = vmax.f32 %v693, 0.0
    %v700 = vmax.f32 %v694, 0.0
    %v701 = vmax.f32 %v695, 0.0
    %v702 = vmax.f32 %v696, 0.0
    %703 = vst [vmem:[#allocation6] sm:$0xff] %v697
    %704 = vst [vmem:[#allocation6 + $0x8] sm:$0xff] %v698
    %705 = vst [vmem:[#allocation6 + $0x10] sm:$0xff] %v699
    %706 = vst [vmem:[#allocation6 + $0x18] sm:$0xff] %v700
    %707 = vst [vmem:[#allocation6 + $0x20] sm:$0xff] %v701
    %708 = vst [vmem:[#allocation6 + $0x28] sm:$0xff] %v702
    // Predicated region
    $region26: #{tpu_custom_call.1} parent=1 // pred_check
      _
    $region27: #{tpu_custom_call.1} parent=1 // pred_check_branch
      %710 = sbr.rel (0) target = $region29
    $region28: #{tpu_custom_call.1} parent=1 // pred_region
      %712 = vsyncadd [#allocation5], 0
      %s714 = sshll.u32 [#allocation6], 4
      %s715 = int_to_ptr.vmem [resolvable:$true] %s714
      %s716 = sshll.u32 %s5, 4
      %s717 = int_to_ptr.hbm [resolvable:$true] %s716
      %719 = dma.vmem_to_hbm [thread:$0]  %s715, 768, %s717, [#allocation5]
    $region29: #{tpu_custom_call.1} parent=1 // pred_fallthru
      _
    // Predicated region
    $region30: #{tpu_custom_call.1} parent=1 // pred_check
      _
    $region31: #{tpu_custom_call.1} parent=1 // pred_check_branch
      %721 = sbr.rel (0) target = $region33
    $region32: #{tpu_custom_call.1} parent=1 // pred_region
      %723 = dma.done [#allocation5], 768
    $region33: #{tpu_custom_call.1} parent=1 // pred_fallthru
      _
    %724 = vsyncpa [#allocation4], 1
    %725 = vsyncpa [#allocation5], 1

</llo_original>
